<compile_context>
chip_gen: v5e
topology: v5e:2x2
jax: 0.10.0
libtpu: 0.0.40
codegen_flags: <defaults>
</compile_context>

<pallas_src>
import functools

import jax
import jax.numpy as jnp
from jax import lax
from jax.experimental import pallas as pl
from jax.experimental.pallas import tpu as pltpu


# --------------------------------------------------------------------------- #
# Kernels
# --------------------------------------------------------------------------- #
def _rmsnorm_kernel(x_ref, g_ref, o_ref, *, scale, eps):
    """Row-wise RMSNorm. x_ref: (T, DIM), g_ref: (1, DIM), o_ref: (T, DIM)."""
    xf = x_ref[...].astype(jnp.float32)
    ss = jnp.sum(xf * xf, axis=-1, keepdims=True)            # (T, 1)
    inv = lax.rsqrt(jnp.maximum(ss, eps * eps))               # 1 / max(||x||, eps)  (EUP)
    g = g_ref[...].astype(jnp.float32) * scale                # fold sqrt(dim) into gamma
    o_ref[...] = (xf * inv * g).astype(o_ref.dtype)


def _rmsnorm_packed_kernel(x_ref, g_ref, m_ref, o_ref, *, scale, eps):
    """Lane-packed RMSNorm for dim < 128.

    Each 128-lane row of x_ref holds G = 128 // dim logical rows back-to-back.
    m_ref is a constant (128, 128) 0/1 mask with M[i, j] = (i//dim == j//dim);
    (x*x) @ M broadcasts each logical row's sum-of-squares to all of its lanes.
    """
    xf = x_ref[...].astype(jnp.float32)                       # (T, 128)
    seg = jnp.dot(xf * xf, m_ref[...],
                  preferred_element_type=jnp.float32)          # (T, 128), per-segment sums
    inv = lax.rsqrt(jnp.maximum(seg, eps * eps))
    g = g_ref[...].astype(jnp.float32) * scale                 # (1, 128): gamma tiled G times
    o_ref[...] = (xf * inv * g).astype(o_ref.dtype)


# --------------------------------------------------------------------------- #
# Tiling helpers
# --------------------------------------------------------------------------- #
def _choose_tile_rows(total_rows, width, itemsize,
                      target_bytes=2 * 1024 * 1024, cap=2048):
    """Largest row-tile with block_bytes ~ target, multiple of 8 (or full rows)."""
    per_row = max(1, width * itemsize)
    t = max(8, target_bytes // per_row)
    t = int(min(t, cap))
    if total_rows <= t:
        return int(total_rows)            # one block == full array (no (8,·) constraint)
    steps = -(-total_rows // t)           # cdiv
    tile = -(-total_rows // steps)        # balance work across grid steps
    tile = ((tile + 7) // 8) * 8          # keep second-to-last dim divisible by 8
    return int(min(tile, total_rows))


def _vmem_limit_bytes(tile, width, in_itemsize, out_itemsize, extra_bytes=0):
    blk_in = tile * width * in_itemsize
    blk_out = tile * width * out_itemsize
    blk_f32 = tile * width * 4
    # 2x double-buffered input + 2x output + f32 intermediates + constants + slack
    need = 2 * blk_in + 2 * blk_out + 3 * blk_f32 + extra_bytes + (1 << 20)
    # Cap at 48 MiB so the same budget is safe on v7x (64 MiB VMEM per TC).
    return int(min(max(need, 16 << 20), 48 << 20))


# --------------------------------------------------------------------------- #
# Wrapper
# --------------------------------------------------------------------------- #
def rmsnorm(x, gamma):
    """RMSNorm over the last axis of x. gamma has shape (x.shape[-1],)."""
    dim = x.shape[-1]
    assert gamma.shape == (dim,)
    scale = float(dim) ** 0.5
    eps = 1e-12

    lead_shape = x.shape[:-1]
    rows = 1
    for s in lead_shape:
        rows *= s
    if rows == 0 or dim == 0:
        return jnp.zeros_like(x)

    in_itemsize = jnp.dtype(x.dtype).itemsize
    out_itemsize = in_itemsize

    # Lane-dense packing path: dim < 128, dim divides 128, rows packable.
    use_packed = (dim < 128) and (128 % dim == 0) and (rows % (128 // dim) == 0)

    if use_packed:
        G = 128 // dim
        width = 128
        prow = rows // G
        x2d = x.reshape(prow, width)                       # free row-major reshape
        g_row = jnp.tile(gamma.reshape(1, dim), (1, G))    # (1, 128), lane j -> gamma[j % dim]
        lane_grp = jnp.arange(width) // dim
        mask = (lane_grp[:, None] == lane_grp[None, :]).astype(jnp.float32)  # (128, 128)

        tile = _choose_tile_rows(prow, width, in_itemsize)
        grid = (pl.cdiv(prow, tile),)
        kernel = functools.partial(_rmsnorm_packed_kernel, scale=scale, eps=eps)

        out2d = pl.pallas_call(
            kernel,
            out_shape=jax.ShapeDtypeStruct((prow, width), x.dtype),
            grid_spec=pltpu.PrefetchScalarGridSpec(
                num_scalar_prefetch=0,
                grid=grid,
                in_specs=[
                    pl.BlockSpec((tile, width), lambda i: (i, 0)),
                    pl.BlockSpec((1, width), lambda i: (0, 0)),
                    pl.BlockSpec((width, width), lambda i: (0, 0)),
                ],
                out_specs=pl.BlockSpec((tile, width), lambda i: (i, 0)),
            ),
            compiler_params=pltpu.CompilerParams(
                dimension_semantics=("parallel",),
                vmem_limit_bytes=_vmem_limit_bytes(
                    tile, width, in_itemsize, out_itemsize,
                    extra_bytes=width * width * 4 + width * 4,
                ),
            ),
        )(x2d, g_row, mask)
        return out2d.reshape(*lead_shape, dim)

    # General path: dim on the lane axis, per-row reduction over lanes.
    x2d = x.reshape(rows, dim)
    g2d = gamma.reshape(1, dim)
    tile = _choose_tile_rows(rows, dim, in_itemsize)
    grid = (pl.cdiv(rows, tile),)                          # ragged last block is fine
    kernel = functools.partial(_rmsnorm_kernel, scale=scale, eps=eps)

    out2d = pl.pallas_call(
        kernel,
        out_shape=jax.ShapeDtypeStruct((rows, dim), x.dtype),
        grid_spec=pltpu.PrefetchScalarGridSpec(
            num_scalar_prefetch=0,
            grid=grid,
            in_specs=[
                pl.BlockSpec((tile, dim), lambda i: (i, 0)),
                pl.BlockSpec((1, dim), lambda i: (0, 0)),
            ],
            out_specs=pl.BlockSpec((tile, dim), lambda i: (i, 0)),
        ),
        compiler_params=pltpu.CompilerParams(
            dimension_semantics=("parallel",),
            vmem_limit_bytes=_vmem_limit_bytes(
                tile, dim, in_itemsize, out_itemsize, extra_bytes=dim * 4
            ),
        ),
    )(x2d, g2d)
    return out2d.reshape(*lead_shape, dim)


# --------------------------------------------------------------------------- #
# Pure-JAX reference (mirrors the PyTorch forward)
# --------------------------------------------------------------------------- #
def rmsnorm_ref(x, gamma):
    dim = x.shape[-1]
    scale = float(dim) ** 0.5
    xf = x.astype(jnp.float32)
    norm = jnp.sqrt(jnp.sum(xf * xf, axis=-1, keepdims=True))
    normed = xf / jnp.maximum(norm, 1e-12)
    return (normed * scale * gamma.astype(jnp.float32)).astype(x.dtype)


if __name__ == "__main__":
    key = jax.random.PRNGKey(0)
    k1, k2, k3, k4 = jax.random.split(key, 4)

    # 1) Small dim (< 128): exercises the lane-packed path (G = 4 rows / lane-row).
    x1 = jax.random.normal(k1, (2, 8, 32), dtype=jnp.float32)
    g1 = 1.0 + 0.1 * jax.random.normal(k2, (32,), dtype=jnp.float32)
    o1 = jax.block_until_ready(rmsnorm(x1, g1))
    assert o1.shape == x1.shape
    assert jnp.allclose(o1, rmsnorm_ref(x1, g1), atol=1e-5, rtol=1e-5), "mismatch (packed path)"

    # 2) dim >= 128: exercises the general lane-reduction path.
    x2 = jax.random.normal(k3, (2, 8, 256), dtype=jnp.float32)
    g2 = jnp.ones((256,), dtype=jnp.float32)
    o2 = jax.block_until_ready(rmsnorm(x2, g2))
    assert jnp.allclose(o2, rmsnorm_ref(x2, g2), atol=1e-5, rtol=1e-5), "mismatch (general path)"

    # 3) Unpackable row count: exercises the small-dim fallback (full-array block).
    x3 = jax.random.normal(k4, (3, 5, 32), dtype=jnp.float32)
    g3 = jnp.ones((32,), dtype=jnp.float32)
    o3 = jax.block_until_ready(rmsnorm(x3, g3))
    assert jnp.allclose(o3, rmsnorm_ref(x3, g3), atol=1e-5, rtol=1e-5), "mismatch (fallback path)"

    print("KERNEL_OK")
</pallas_src>

<mosaic_0001>
module attributes {stable_mosaic.version = 11 : i64} {
  func.func @_rmsnorm_packed_kernel(%arg0: i32, %arg1: memref<4x128xf32, #tpu.memory_space<vmem>>, %arg2: memref<1x128xf32, #tpu.memory_space<vmem>>, %arg3: memref<128x128xf32, #tpu.memory_space<vmem>>, %arg4: memref<4x128xf32, #tpu.memory_space<vmem>>) attributes {dimension_semantics = [#tpu.dimension_semantics<parallel>], iteration_bounds = array<i64: 1>, scalar_prefetch = 0 : i64, scratch_operands = 0 : i64, tpu.core_type = #tpu.core_type<tc>, window_params = [{transform_indices = @transform_0, window_bounds = array<i64: 4, 128>}, {pipeline_mode = #tpu.pipeline_mode<synchronous>, transform_indices = @transform_1, window_bounds = array<i64: 1, 128>}, {pipeline_mode = #tpu.pipeline_mode<synchronous>, transform_indices = @transform_2, window_bounds = array<i64: 128, 128>}, {transform_indices = @transform_3, window_bounds = array<i64: 4, 128>}]} {
    %c0 = arith.constant 0 : index
    %c0_0 = arith.constant 0 : index
    %0 = vector.load %arg1[%c0, %c0_0] : memref<4x128xf32, #tpu.memory_space<vmem>>, vector<4x128xf32>
    %1 = arith.mulf %0, %0 : vector<4x128xf32>
    %c0_1 = arith.constant 0 : index
    %c0_2 = arith.constant 0 : index
    %2 = vector.load %arg3[%c0_1, %c0_2] : memref<128x128xf32, #tpu.memory_space<vmem>>, vector<128x128xf32>
    %cst = arith.constant dense<0.000000e+00> : vector<4x128xf32>
    %3 = tpu.matmul %1, %2, %cst {dimension_numbers = #tpu.dot_dimension_numbers<[1], [0], [0], [1], [0, 0, 1, 1], [], []>} : vector<4x128xf32>, vector<128x128xf32>, vector<4x128xf32> -> vector<4x128xf32>
    %cst_3 = arith.constant 1.000000e-24 : f32
    %4 = vector.broadcast %cst_3 : f32 to vector<4x128xf32>
    %5 = arith.maximumf %3, %4 : vector<4x128xf32>
    %6 = math.rsqrt %5 : vector<4x128xf32>
    %c0_4 = arith.constant 0 : index
    %c0_5 = arith.constant 0 : index
    %7 = vector.load %arg2[%c0_4, %c0_5] : memref<1x128xf32, #tpu.memory_space<vmem>>, vector<1x128xf32>
    %cst_6 = arith.constant 5.65685415 : f32
    %8 = vector.broadcast %cst_6 : f32 to vector<1x128xf32>
    %9 = arith.mulf %7, %8 : vector<1x128xf32>
    %10 = arith.mulf %0, %6 : vector<4x128xf32>
    %11 = vector.broadcast %9 : vector<1x128xf32> to vector<4x128xf32>
    %12 = arith.mulf %10, %11 : vector<4x128xf32>
    %c0_7 = arith.constant 0 : index
    %c0_8 = arith.constant 0 : index
    %13 = vector.load %arg4[%c0_7, %c0_8] : memref<4x128xf32, #tpu.memory_space<vmem>>, vector<4x128xf32>
    tpu.vector_store %arg4[%c0_7, %c0_8], %12 {strides = array<i32>} : memref<4x128xf32, #tpu.memory_space<vmem>>, vector<4x128xf32>,
    return
  }
  func.func @transform_0(%arg0: i32) -> (i32, i32) {
    %c0_i32 = arith.constant 0 : i32
    %c0_i32_0 = arith.constant 0 : i32
    return %arg0, %c0_i32 : i32, i32
  }
  func.func @transform_1(%arg0: i32) -> (i32, i32) {
    %c0_i32 = arith.constant 0 : i32
    %c0_i32_0 = arith.constant 0 : i32
    %c0_i32_1 = arith.constant 0 : i32
    return %c0_i32, %c0_i32_0 : i32, i32
  }
  func.func @transform_2(%arg0: i32) -> (i32, i32) {
    %c0_i32 = arith.constant 0 : i32
    %c0_i32_0 = arith.constant 0 : i32
    %c0_i32_1 = arith.constant 0 : i32
    return %c0_i32, %c0_i32_0 : i32, i32
  }
  func.func @transform_3(%arg0: i32) -> (i32, i32) {
    %c0_i32 = arith.constant 0 : i32
    %c0_i32_0 = arith.constant 0 : i32
    return %arg0, %c0_i32 : i32, i32
  }
}

</mosaic_0001>

<llo_original>
// kernel: tpu_custom_call.1
$region0: #{tpu_custom_call.1}
  #allocation0 [shape = 'u32[]', space=smem, size = 0x4, offset = 0x4, fixed_abs, tag = 'smem constant byte address 0x4 - core index']
  #allocation1 [shape = 'u32[72,128]{1,0:T(1,128)}', space=vmem, size = 0x9000, scoped, tag = 'internal scratch']
  %s0 = inlined_call_operand.hbm [shape: f32[4,128], index: 0, kind: input, shape index: {}]
  %s1 = inlined_call_operand.hbm [shape: f32[1,128], index: 1, kind: input, shape index: {}]
  %s2 = inlined_call_operand.hbm [shape: f32[128,128], index: 2, kind: input, shape index: {}]
  %s3 = inlined_call_operand.hbm [shape: f32[4,128], index: 3, kind: output, shape index: {}]
  %s4 = sld [smem:[#allocation0]]
  $region34: #{tpu_custom_call.1} parent=0
    _
  %s6 = ssub.s32 1, %s4
  %s7 = scalar_select 0, %s6, %s4
  $region1: #{tpu_custom_call.1} parent=0
    #allocation2 [shape = 'u8[2048]{0}', space=vmem, size = 0x800, scoped, tag = 'input window, operand 0, single buffered']
    #allocation3 [shape = 's32[1]{0}', space=sflag, size = 0x4, scoped, tag = 'scoped memory for tpu_custom_call.1']
    #allocation4 [shape = 's32[1]{0}', space=sflag, size = 0x4, scoped, tag = 'scoped memory for tpu_custom_call.1']
    #allocation5 [shape = 'u8[512]{0}', space=vmem, size = 0x400, scoped, tag = 'input window, operand 1, single buffered']
    #allocation6 [shape = 's32[1]{0}', space=sflag, size = 0x4, scoped, tag = 'scoped memory for tpu_custom_call.1']
    #allocation7 [shape = 'u8[65536]{0}', space=vmem, size = 0x10000, scoped, tag = 'input window, operand 2, single buffered']
    #allocation8 [shape = 'u8[2048]{0}', space=vmem, size = 0x800, scoped, tag = 'output window, operand 0, single buffered']
    %8 = vsyncpa [#allocation3], 0
    %9 = vsyncpa [#allocation6], 0
    %10 = vsyncpa [#allocation4], 0
    // Predicated region
    $region2: #{tpu_custom_call.1} parent=1 // pred_check
      _
    $region3: #{tpu_custom_call.1} parent=1 // pred_check_branch
      %12 = sbr.rel (0) target = $region5
    $region4: #{tpu_custom_call.1} parent=1 // pred_region
      %14 = vsyncadd [#allocation3], 0
      %s16 = sshll.u32 %s0, 4
      %s17 = int_to_ptr.hbm [resolvable:$true] %s16
      %s18 = sshll.u32 [#allocation2], 4
      %s19 = int_to_ptr.vmem [resolvable:$true] %s18
      %21 = dma.hbm_to_vmem [thread:$0]  %s17, 64, %s19, [#allocation3]
    $region5: #{tpu_custom_call.1} parent=1 // pred_fallthru
      _
    // Predicated region
    $region6: #{tpu_custom_call.1} parent=1 // pred_check
      _
    $region7: #{tpu_custom_call.1} parent=1 // pred_check_branch
      %23 = sbr.rel (0) target = $region9
    $region8: #{tpu_custom_call.1} parent=1 // pred_region
      %25 = vsyncadd [#allocation6], 0
      %s27 = sshll.u32 %s1, 4
      %s28 = int_to_ptr.hbm [resolvable:$true] %s27
      %s29 = sshll.u32 [#allocation5], 4
      %s30 = int_to_ptr.vmem [resolvable:$true] %s29
      %32 = dma.hbm_to_vmem [thread:$0]  %s28, 16, %s30, [#allocation6]
    $region9: #{tpu_custom_call.1} parent=1 // pred_fallthru
      _
    // Predicated region
    $region10: #{tpu_custom_call.1} parent=1 // pred_check
      _
    $region11: #{tpu_custom_call.1} parent=1 // pred_check_branch
      %34 = sbr.rel (0) target = $region13
    $region12: #{tpu_custom_call.1} parent=1 // pred_region
      %36 = vsyncadd [#allocation6], 0
      %s37 = sshll.u32 %s2, 4
      %s38 = int_to_ptr.hbm [resolvable:$true] %s37
      %s39 = sshll.u32 [#allocation7], 4
      %s40 = int_to_ptr.vmem [resolvable:$true] %s39
      %45 = dma.hbm_to_vmem [thread:$0]  %s38, 2048, %s40, [#allocation6], 128, 128, 8
    $region13: #{tpu_custom_call.1} parent=1 // pred_fallthru
      _
    // Predicated region
    $region14: #{tpu_custom_call.1} parent=1 // pred_check
      _
    $region15: #{tpu_custom_call.1} parent=1 // pred_check_branch
      %47 = sbr.rel (0) target = $region17
    $region16: #{tpu_custom_call.1} parent=1 // pred_region
      %49 = dma.done [#allocation3], 64
    $region17: #{tpu_custom_call.1} parent=1 // pred_fallthru
      _
    // Predicated region
    $region18: #{tpu_custom_call.1} parent=1 // pred_check
      _
    $region19: #{tpu_custom_call.1} parent=1 // pred_check_branch
      %51 = sbr.rel (0) target = $region21
    $region20: #{tpu_custom_call.1} parent=1 // pred_region
      %53 = dma.done [#allocation6], 16
    $region21: #{tpu_custom_call.1} parent=1 // pred_fallthru
      _
    // Predicated region
    $region22: #{tpu_custom_call.1} parent=1 // pred_check
      _
    $region23: #{tpu_custom_call.1} parent=1 // pred_check_branch
      %55 = sbr.rel (0) target = $region25
    $region24: #{tpu_custom_call.1} parent=1 // pred_region
      %57 = dma.done [#allocation6], 2048
    $region25: #{tpu_custom_call.1} parent=1 // pred_fallthru
      _
    %v58 = vld [vmem:[#allocation2] sm:$0xf]
    %v59 = vmul.f32 %v58, %v58
    %v60 = vld [vmem:[#allocation7] sm:$0xff]
    %v61 = vld [vmem:[#allocation7 + $0x8] sm:$0xff]
    %v62 = vld [vmem:[#allocation7 + $0x10] sm:$0xff]
    %v63 = vld [vmem:[#allocation7 + $0x18] sm:$0xff]
    %v64 = vld [vmem:[#allocation7 + $0x20] sm:$0xff]
    %v65 = vld [vmem:[#allocation7 + $0x28] sm:$0xff]
    %v66 = vld [vmem:[#allocation7 + $0x30] sm:$0xff]
    %v67 = vld [vmem:[#allocation7 + $0x38] sm:$0xff]
    %v68 = vld [vmem:[#allocation7 + $0x40] sm:$0xff]
    %v69 = vld [vmem:[#allocation7 + $0x48] sm:$0xff]
    %v70 = vld [vmem:[#allocation7 + $0x50] sm:$0xff]
    %v71 = vld [vmem:[#allocation7 + $0x58] sm:$0xff]
    %v72 = vld [vmem:[#allocation7 + $0x60] sm:$0xff]
    %v73 = vld [vmem:[#allocation7 + $0x68] sm:$0xff]
    %v74 = vld [vmem:[#allocation7 + $0x70] sm:$0xff]
    %v75 = vld [vmem:[#allocation7 + $0x78] sm:$0xff]
    %76 = vmatpush.msra.mxu0 %v75
    %77 = vmatpush.msra.mxu0 %v74
    %78 = vmatpush.msra.mxu0 %v73
    %79 = vmatpush.msra.mxu0 %v72
    %80 = vmatpush.msra.mxu0 %v71
    %81 = vmatpush.msra.mxu0 %v70
    %82 = vmatpush.msra.mxu0 %v69
    %83 = vmatpush.msra.mxu0 %v68
    %84 = vmatpush.msra.mxu0 %v67
    %85 = vmatpush.msra.mxu0 %v66
    %86 = vmatpush.msra.mxu0 %v65
    %87 = vmatpush.msra.mxu0 %v64
    %88 = vmatpush.msra.mxu0 %v63
    %89 = vmatpush.msra.mxu0 %v62
    %90 = vmatpush.msra.mxu0 %v61
    %91 = vmatpush.msra.mxu0 %v60
    %92 = vmatmul.f32.gmra.mxu0 %v59
    %v93 = vpop.f32.mrf.mxu0
    %v94 = vadd.f32 0.0, %v93
    %95 = vdwg.mxu0
    %v96 = vmax.f32 %v94, 1e-24
    %v97 = vrsqrt.pop %v96
    %v98 = vmul.f32 %v97, %v96
    %v99 = vmul.f32 %v98, %v97
    %v100 = vmul.f32 0.5, %v99
    %v101 = vsub.f32 1.5, %v100
    %v102 = vmul.f32 %v97, %v101
    %vm103 = vweird.f32 %v96
    %vm104 = vweird.f32 %v97
    %vm105 = vmor %vm103, %vm104
    %v106 = vsel %vm105, %v97, %v102
    %v107 = vld [vmem:[#allocation5] sm:$0x1]
    %v108 = vmul.f32 %v107, 5.656854
    %v109 = vmul.f32 %v58, %v106
    %v111 = vperm.slane %v108, 0
    %v113 = vmul.f32 %v109, %v111
    %114 = vst [vmem:[#allocation8] sm:$0xf] %v113
    // Predicated region
    $region26: #{tpu_custom_call.1} parent=1 // pred_check
      _
    $region27: #{tpu_custom_call.1} parent=1 // pred_check_branch
      %116 = sbr.rel (0) target = $region29
    $region28: #{tpu_custom_call.1} parent=1 // pred_region
      %118 = vsyncadd [#allocation4], 0
      %s120 = sshll.u32 [#allocation8], 4
      %s121 = int_to_ptr.vmem [resolvable:$true] %s120
      %s122 = sshll.u32 %s3, 4
      %s123 = int_to_ptr.hbm [resolvable:$true] %s122
      %125 = dma.vmem_to_hbm [thread:$0]  %s121, 64, %s123, [#allocation4]
    $region29: #{tpu_custom_call.1} parent=1 // pred_fallthru
      _
    // Predicated region
    $region30: #{tpu_custom_call.1} parent=1 // pred_check
      _
    $region31: #{tpu_custom_call.1} parent=1 // pred_check_branch
      %127 = sbr.rel (0) target = $region33
    $region32: #{tpu_custom_call.1} parent=1 // pred_region
      %129 = dma.done [#allocation4], 64
    $region33: #{tpu_custom_call.1} parent=1 // pred_fallthru
      _
    %130 = vsyncpa [#allocation3], 1
    %131 = vsyncpa [#allocation6], 1
    %132 = vsyncpa [#allocation4], 1

</llo_original>
